<compile_context>
chip_gen: v6e
topology: v6e:2x2x1
jax: 0.10.0
libtpu: 0.0.40
codegen_flags: <defaults>
</compile_context>

<pallas_src>
import jax
import jax.numpy as jnp
from jax.experimental import pallas as pl
from jax.experimental.pallas import tpu as pltpu

# ----------------------------------------------------------------------------
# Static packing layout (module-level so in-kernel slice offsets stay static).
# ----------------------------------------------------------------------------
ENCODER_DIMS = {                 # name: (in_features, out_features)
    "text_enc": (32, 128),
    "imu_encL": (64, 256),
    "imu_encR": (64, 256),
    "pose_enc": (48, 128),
}
K_PAD = 128                      # per-encoder K padded to one lane tile
_NAMES = tuple(ENCODER_DIMS)
_OUT_WIDTHS = tuple(d[1] for d in ENCODER_DIMS.values())      # (128,256,256,128)
_OUT_OFFSETS = tuple(sum(_OUT_WIDTHS[:i]) for i in range(len(_OUT_WIDTHS)))
TOTAL_OUT = sum(_OUT_WIDTHS)     # 768
TOTAL_K = K_PAD * len(_NAMES)    # 512


# ----------------------------------------------------------------------------
# Fused Pallas kernel: all four encoders, one block, no grid, 4 DMAs total.
# ----------------------------------------------------------------------------
def _fused_quad_encoder_kernel(x_ref, w_ref, b_ref, o_ref):
    # x_ref: (B, 512) bf16   -- four (B,128) inputs, lane-concatenated
    # w_ref: (128, 768) bf16 -- four (128,out_i) weights, lane-concatenated
    # b_ref: (1, 768) f32
    # o_ref: (B, 768) f32
    for i, (off, width) in enumerate(zip(_OUT_OFFSETS, _OUT_WIDTHS)):
        x = x_ref[:, i * K_PAD:(i + 1) * K_PAD]          # 128-aligned lane slice
        w = w_ref[:, off:off + width]                    # 128-aligned lane slice
        y = jnp.dot(x, w, preferred_element_type=jnp.float32)
        y = y + b_ref[:, off:off + width]                # (1, out) broadcast
        o_ref[:, off:off + width] = jnp.maximum(y, 0.0).astype(o_ref.dtype)


# ----------------------------------------------------------------------------
# Parameters: per-encoder init, then one-time slab packing (outside hot path).
# ----------------------------------------------------------------------------
def init_params(key, dims=ENCODER_DIMS):
    """PyTorch nn.Linear-style uniform(+-1/sqrt(fan_in)) init, per-layer keys
    derived from the layer index (reproducible across processes)."""
    params = {}
    for i, (name, (din, dout)) in enumerate(dims.items()):
        kw, kb = jax.random.split(jax.random.fold_in(key, i))
        bound = 1.0 / (din ** 0.5)
        w = jax.random.uniform(kw, (din, dout), jnp.float32, -bound, bound)
        b = jax.random.uniform(kb, (dout,), jnp.float32, -bound, bound)
        params[name] = {"w": w, "b": b}
    return params


def pack_params(params, weight_dtype=jnp.bfloat16):
    """Pack the four encoders' weights/biases into two lane-concatenated slabs.
    K is zero-padded to 128 (exact math); all output offsets are 128-aligned."""
    w_cols, b_cols = [], []
    for name in _NAMES:
        w = params[name]["w"]
        din = w.shape[0]
        w_cols.append(jnp.pad(w, ((0, K_PAD - din), (0, 0))))
        b_cols.append(params[name]["b"])
    w_slab = jnp.concatenate(w_cols, axis=1).astype(weight_dtype)   # (128, 768)
    b_slab = jnp.concatenate(b_cols)[None, :].astype(jnp.float32)   # (1, 768)
    return {"w": w_slab, "b": b_slab}


# ----------------------------------------------------------------------------
# Forward
# ----------------------------------------------------------------------------
def _pad_k(x):
    return jnp.pad(x, ((0, 0), (0, K_PAD - x.shape[1])))


def quad_modal_forward(packed, text_input, imu_inputL, imu_inputR, pose_input):
    B = text_input.shape[0]
    out_dtype = text_input.dtype

    # One (B, 512) bf16 input slab; pad/concat/cast fuse into one XLA op chain.
    x_slab = jnp.concatenate(
        [_pad_k(text_input), _pad_k(imu_inputL), _pad_k(imu_inputR),
         _pad_k(pose_input)], axis=1).astype(packed["w"].dtype)

    flops = 2 * B * K_PAD * TOTAL_OUT
    bytes_accessed = (
        x_slab.size * x_slab.dtype.itemsize
        + packed["w"].size * packed["w"].dtype.itemsize
        + packed["b"].size * packed["b"].dtype.itemsize
        + B * TOTAL_OUT * 4)

    vmem = pl.BlockSpec(memory_space=pltpu.VMEM)
    out_slab = pl.pallas_call(
        _fused_quad_encoder_kernel,
        out_shape=jax.ShapeDtypeStruct((B, TOTAL_OUT), jnp.float32),
        in_specs=[vmem, vmem, vmem],
        out_specs=vmem,
        cost_estimate=pl.CostEstimate(
            flops=flops, transcendentals=0, bytes_accessed=bytes_accessed),
    )(x_slab, packed["w"], packed["b"])

    # Split the output slab back into the module's 4-tuple (cheap XLA slices).
    return tuple(out_slab[:, off:off + width].astype(out_dtype)
                 for off, width in zip(_OUT_OFFSETS, _OUT_WIDTHS))


# ----------------------------------------------------------------------------
# Demo / self-check
# ----------------------------------------------------------------------------
if __name__ == "__main__":
    B = 2
    TEXT_IN = ENCODER_DIMS["text_enc"][0]
    IMU_IN = ENCODER_DIMS["imu_encL"][0]
    POSE_IN = ENCODER_DIMS["pose_enc"][0]

    root = jax.random.PRNGKey(0)
    pkey, dkey = jax.random.split(root)
    params = init_params(pkey)
    packed = pack_params(params)

    k1, k2, k3, k4 = jax.random.split(dkey, 4)
    text_input = jax.random.normal(k1, (B, TEXT_IN), jnp.float32)
    imu_inputL = jax.random.normal(k2, (B, IMU_IN), jnp.float32)
    imu_inputR = jax.random.normal(k3, (B, IMU_IN), jnp.float32)
    pose_input = jax.random.normal(k4, (B, POSE_IN), jnp.float32)

    fwd = jax.jit(quad_modal_forward)
    outputs = jax.block_until_ready(
        fwd(packed, text_input, imu_inputL, imu_inputR, pose_input))

    # Plain-JAX reference with the same bf16 operand precision / f32 accumulation.
    def ref_encoder(x, p, weight_dtype=jnp.bfloat16):
        y = jnp.dot(x.astype(weight_dtype), p["w"].astype(weight_dtype),
                    preferred_element_type=jnp.float32) + p["b"]
        return jnp.maximum(y, 0.0)

    refs = (ref_encoder(text_input, params["text_enc"]),
            ref_encoder(imu_inputL, params["imu_encL"]),
            ref_encoder(imu_inputR, params["imu_encR"]),
            ref_encoder(pose_input, params["pose_enc"]))
    for out, ref in zip(outputs, refs):
        assert out.shape == ref.shape, (out.shape, ref.shape)
        assert jnp.allclose(out, ref, atol=5e-3, rtol=5e-3), \
            float(jnp.max(jnp.abs(out - ref)))

    print("KERNEL_OK")
</pallas_src>

<mosaic_0001>
module attributes {stable_mosaic.version = 11 : i64} {
  func.func @_fused_quad_encoder_kernel(%arg0: memref<2x512xbf16, #tpu.memory_space<vmem>>, %arg1: memref<128x768xbf16, #tpu.memory_space<vmem>>, %arg2: memref<1x768xf32, #tpu.memory_space<vmem>>, %arg3: memref<2x768xf32, #tpu.memory_space<vmem>>) attributes {dimension_semantics = [], scalar_prefetch = 0 : i64, scratch_operands = 0 : i64, tpu.core_type = #tpu.core_type<tc>} {
    %c0 = arith.constant 0 : index
    %c0_0 = arith.constant 0 : index
    %0 = vector.load %arg0[%c0, %c0_0] : memref<2x512xbf16, #tpu.memory_space<vmem>>, vector<2x128xbf16>
    %c0_1 = arith.constant 0 : index
    %c0_2 = arith.constant 0 : index
    %1 = vector.load %arg1[%c0_1, %c0_2] : memref<128x768xbf16, #tpu.memory_space<vmem>>, vector<128x128xbf16>
    %cst = arith.constant dense<0.000000e+00> : vector<2x128xf32>
    %2 = tpu.matmul %0, %1, %cst {dimension_numbers = #tpu.dot_dimension_numbers<[1], [0], [0], [1], [0, 0, 1, 1], [], []>} : vector<2x128xbf16>, vector<128x128xbf16>, vector<2x128xf32> -> vector<2x128xf32>
    %c0_3 = arith.constant 0 : index
    %c0_4 = arith.constant 0 : index
    %3 = vector.load %arg2[%c0_3, %c0_4] : memref<1x768xf32, #tpu.memory_space<vmem>>, vector<1x128xf32>
    %4 = vector.broadcast %3 : vector<1x128xf32> to vector<2x128xf32>
    %5 = arith.addf %2, %4 : vector<2x128xf32>
    %cst_5 = arith.constant 0.000000e+00 : f32
    %6 = vector.broadcast %cst_5 : f32 to vector<2x128xf32>
    %7 = arith.maximumf %5, %6 : vector<2x128xf32>
    %c0_6 = arith.constant 0 : index
    %c0_7 = arith.constant 0 : index
    %8 = vector.load %arg3[%c0_6, %c0_7] : memref<2x768xf32, #tpu.memory_space<vmem>>, vector<2x128xf32>
    tpu.vector_store %arg3[%c0_6, %c0_7], %7 {strides = array<i32>} : memref<2x768xf32, #tpu.memory_space<vmem>>, vector<2x128xf32>,
    %c0_8 = arith.constant 0 : index
    %c128 = arith.constant 128 : index
    %9 = vector.load %arg0[%c0_8, %c128] : memref<2x512xbf16, #tpu.memory_space<vmem>>, vector<2x128xbf16>
    %c0_9 = arith.constant 0 : index
    %c128_10 = arith.constant 128 : index
    %10 = vector.load %arg1[%c0_9, %c128_10] : memref<128x768xbf16, #tpu.memory_space<vmem>>, vector<128x256xbf16>
    %cst_11 = arith.constant dense<0.000000e+00> : vector<2x256xf32>
    %11 = tpu.matmul %9, %10, %cst_11 {dimension_numbers = #tpu.dot_dimension_numbers<[1], [0], [0], [1], [0, 0, 1, 1], [], []>} : vector<2x128xbf16>, vector<128x256xbf16>, vector<2x256xf32> -> vector<2x256xf32>
    %c0_12 = arith.constant 0 : index
    %c128_13 = arith.constant 128 : index
    %12 = vector.load %arg2[%c0_12, %c128_13] : memref<1x768xf32, #tpu.memory_space<vmem>>, vector<1x256xf32>
    %13 = vector.broadcast %12 : vector<1x256xf32> to vector<2x256xf32>
    %14 = arith.addf %11, %13 : vector<2x256xf32>
    %cst_14 = arith.constant 0.000000e+00 : f32
    %15 = vector.broadcast %cst_14 : f32 to vector<2x256xf32>
    %16 = arith.maximumf %14, %15 : vector<2x256xf32>
    %c0_15 = arith.constant 0 : index
    %c128_16 = arith.constant 128 : index
    %17 = vector.load %arg3[%c0_15, %c128_16] : memref<2x768xf32, #tpu.memory_space<vmem>>, vector<2x256xf32>
    tpu.vector_store %arg3[%c0_15, %c128_16], %16 {strides = array<i32>} : memref<2x768xf32, #tpu.memory_space<vmem>>, vector<2x256xf32>,
    %c0_17 = arith.constant 0 : index
    %c256 = arith.constant 256 : index
    %18 = vector.load %arg0[%c0_17, %c256] : memref<2x512xbf16, #tpu.memory_space<vmem>>, vector<2x128xbf16>
    %c0_18 = arith.constant 0 : index
    %c384 = arith.constant 384 : index
    %19 = vector.load %arg1[%c0_18, %c384] : memref<128x768xbf16, #tpu.memory_space<vmem>>, vector<128x256xbf16>
    %cst_19 = arith.constant dense<0.000000e+00> : vector<2x256xf32>
    %20 = tpu.matmul %18, %19, %cst_19 {dimension_numbers = #tpu.dot_dimension_numbers<[1], [0], [0], [1], [0, 0, 1, 1], [], []>} : vector<2x128xbf16>, vector<128x256xbf16>, vector<2x256xf32> -> vector<2x256xf32>
    %c0_20 = arith.constant 0 : index
    %c384_21 = arith.constant 384 : index
    %21 = vector.load %arg2[%c0_20, %c384_21] : memref<1x768xf32, #tpu.memory_space<vmem>>, vector<1x256xf32>
    %22 = vector.broadcast %21 : vector<1x256xf32> to vector<2x256xf32>
    %23 = arith.addf %20, %22 : vector<2x256xf32>
    %cst_22 = arith.constant 0.000000e+00 : f32
    %24 = vector.broadcast %cst_22 : f32 to vector<2x256xf32>
    %25 = arith.maximumf %23, %24 : vector<2x256xf32>
    %c0_23 = arith.constant 0 : index
    %c384_24 = arith.constant 384 : index
    %26 = vector.load %arg3[%c0_23, %c384_24] : memref<2x768xf32, #tpu.memory_space<vmem>>, vector<2x256xf32>
    tpu.vector_store %arg3[%c0_23, %c384_24], %25 {strides = array<i32>} : memref<2x768xf32, #tpu.memory_space<vmem>>, vector<2x256xf32>,
    %c0_25 = arith.constant 0 : index
    %c384_26 = arith.constant 384 : index
    %27 = vector.load %arg0[%c0_25, %c384_26] : memref<2x512xbf16, #tpu.memory_space<vmem>>, vector<2x128xbf16>
    %c0_27 = arith.constant 0 : index
    %c640 = arith.constant 640 : index
    %28 = vector.load %arg1[%c0_27, %c640] : memref<128x768xbf16, #tpu.memory_space<vmem>>, vector<128x128xbf16>
    %cst_28 = arith.constant dense<0.000000e+00> : vector<2x128xf32>
    %29 = tpu.matmul %27, %28, %cst_28 {dimension_numbers = #tpu.dot_dimension_numbers<[1], [0], [0], [1], [0, 0, 1, 1], [], []>} : vector<2x128xbf16>, vector<128x128xbf16>, vector<2x128xf32> -> vector<2x128xf32>
    %c0_29 = arith.constant 0 : index
    %c640_30 = arith.constant 640 : index
    %30 = vector.load %arg2[%c0_29, %c640_30] : memref<1x768xf32, #tpu.memory_space<vmem>>, vector<1x128xf32>
    %31 = vector.broadcast %30 : vector<1x128xf32> to vector<2x128xf32>
    %32 = arith.addf %29, %31 : vector<2x128xf32>
    %cst_31 = arith.constant 0.000000e+00 : f32
    %33 = vector.broadcast %cst_31 : f32 to vector<2x128xf32>
    %34 = arith.maximumf %32, %33 : vector<2x128xf32>
    %c0_32 = arith.constant 0 : index
    %c640_33 = arith.constant 640 : index
    %35 = vector.load %arg3[%c0_32, %c640_33] : memref<2x768xf32, #tpu.memory_space<vmem>>, vector<2x128xf32>
    tpu.vector_store %arg3[%c0_32, %c640_33], %34 {strides = array<i32>} : memref<2x768xf32, #tpu.memory_space<vmem>>, vector<2x128xf32>,
    return
  }
}

</mosaic_0001>

<llo_original>
// kernel: quad_modal_forward.1
$region0: #{quad_modal_forward.1}
  #allocation0 [shape = 'u32[]', space=smem, size = 0x4, offset = 0x4, fixed_abs, tag = 'smem constant byte address 0x4 - core index']
  #allocation1 [shape = 'u32[144,128]{1,0:T(1,128)}', space=vmem, size = 0x12000, scoped, tag = 'internal scratch']
  %s0 = inlined_call_operand.vmem [shape: bf16[2,512], index: 0, kind: input, shape index: {}]
  %s1 = inlined_call_operand.hbm [shape: bf16[128,768], index: 1, kind: input, shape index: {}]
  %s2 = inlined_call_operand.vmem [shape: f32[1,768], index: 2, kind: input, shape index: {}]
  %s3 = inlined_call_operand.vmem [shape: f32[2,768], index: 3, kind: output, shape index: {}]
  %s4 = sld [smem:[#allocation0]]
  $region26: #{quad_modal_forward.1} parent=0
    _
  %s6 = ssub.s32 1, %s4
  %s7 = scalar_select 0, %s6, %s4
  $region1: #{quad_modal_forward.1} parent=0
    #allocation2 [shape = 'u8[196608]{0}', space=vmem, size = 0x30000, scoped, tag = 'input window, operand 1, single buffered']
    #allocation3 [shape = 's32[1]{0}', space=sflag, size = 0x4, scoped, tag = 'scoped memory for quad_modal_forward.1']
    %8 = vsyncpa [#allocation3], 0
    // Predicated region
    $region2: #{quad_modal_forward.1} parent=1 // pred_check
      _
    $region3: #{quad_modal_forward.1} parent=1 // pred_check_branch
      %10 = sbr.rel (0) target = $region5
    $region4: #{quad_modal_forward.1} parent=1 // pred_region
      _
    $region5: #{quad_modal_forward.1} parent=1 // pred_fallthru
      _
    // Predicated region
    $region6: #{quad_modal_forward.1} parent=1 // pred_check
      _
    $region7: #{quad_modal_forward.1} parent=1 // pred_check_branch
      %12 = sbr.rel (0) target = $region9
    $region8: #{quad_modal_forward.1} parent=1 // pred_region
      %s14 = ssub.s32 6144, 6144
      %15 = vsyncadd [#allocation3], %s14
      %s16 = sshll.u32 [#allocation2], 4
      %s17 = int_to_ptr.vmem [resolvable:$true] %s16
      %22 = dma.hbm_to_vmem [thread:$0]  %s1, 6144, %s17, [#allocation3], 384, 384, 24
    $region9: #{quad_modal_forward.1} parent=1 // pred_fallthru
      _
    // Predicated region
    $region10: #{quad_modal_forward.1} parent=1 // pred_check
      _
    $region11: #{quad_modal_forward.1} parent=1 // pred_check_branch
      %24 = sbr.rel (0) target = $region13
    $region12: #{quad_modal_forward.1} parent=1 // pred_region
      _
    $region13: #{quad_modal_forward.1} parent=1 // pred_fallthru
      _
    // Predicated region
    $region14: #{quad_modal_forward.1} parent=1 // pred_check
      _
    $region15: #{quad_modal_forward.1} parent=1 // pred_check_branch
      %26 = sbr.rel (0) target = $region17
    $region16: #{quad_modal_forward.1} parent=1 // pred_region
      %27 = dma.done [#allocation3], 6144
    $region17: #{quad_modal_forward.1} parent=1 // pred_fallthru
      _
    %v29 = vld [vmem:[%s0] sm:$0x1]
    %v30 = vld [vmem:[#allocation2] sm:$0xf]
    %v31 = vld [vmem:[#allocation2 + $0x18] sm:$0xf]
    %v32 = vld [vmem:[#allocation2 + $0x30] sm:$0xf]
    %v33 = vld [vmem:[#allocation2 + $0x48] sm:$0xf]
    %v34 = vld [vmem:[#allocation2 + $0x60] sm:$0xf]
    %v35 = vld [vmem:[#allocation2 + $0x78] sm:$0xf]
    %v36 = vld [vmem:[#allocation2 + $0x90] sm:$0xf]
    %v37 = vld [vmem:[#allocation2 + $0xa8] sm:$0xf]
    %v38 = vld [vmem:[#allocation2 + $0xc0] sm:$0xf]
    %v39 = vld [vmem:[#allocation2 + $0xd8] sm:$0xf]
    %v40 = vld [vmem:[#allocation2 + $0xf0] sm:$0xf]
    %v41 = vld [vmem:[#allocation2 + $0x108] sm:$0xf]
    %v42 = vld [vmem:[#allocation2 + $0x120] sm:$0xf]
    %v43 = vld [vmem:[#allocation2 + $0x138] sm:$0xf]
    %v44 = vld [vmem:[#allocation2 + $0x150] sm:$0xf]
    %v45 = vld [vmem:[#allocation2 + $0x168] sm:$0xf]
    %v46 = vld [vmem:[%s2] sm:$0x1]
    %v48 = vlaneseq
    %v49 = vshrl.u32 %v48, 7
    %v50 = vsub.s32 0, %v49
    %v51 = vrot.slane %v46, %v50
    %v69 = vunpack.c.l.b16 %v30
    %v70 = vunpack.c.l.b16 %v31
    %v71 = vunpack.c.l.b16 %v32
    %v72 = vunpack.c.l.b16 %v33
    %v73 = vunpack.c.l.b16 %v34
    %v74 = vunpack.c.l.b16 %v35
    %v75 = vunpack.c.l.b16 %v36
    %v76 = vunpack.c.l.b16 %v37
    %v77 = vunpack.c.l.b16 %v38
    %v78 = vunpack.c.l.b16 %v39
    %v79 = vunpack.c.l.b16 %v40
    %v80 = vunpack.c.l.b16 %v41
    %v81 = vunpack.c.l.b16 %v42
    %v82 = vunpack.c.l.b16 %v43
    %v83 = vunpack.c.l.b16 %v44
    %v84 = vunpack.c.l.b16 %v45
    %v85 = vpack.c.b16 %v70, %v69
    %v86 = vpack.c.b16 %v72, %v71
    %v87 = vpack.c.b16 %v74, %v73
    %v88 = vpack.c.b16 %v76, %v75
    %v89 = vpack.c.b16 %v78, %v77
    %v90 = vpack.c.b16 %v80, %v79
    %v91 = vpack.c.b16 %v82, %v81
    %v92 = vpack.c.b16 %v84, %v83
    %101 = vmatprep.subr.bf16.mxu0 0
    %102 = vmatpush1.bf16.msra.mxu0 %v92
    %103 = vmatprep.subr.bf16.mxu0 0
    %104 = vmatpush1.bf16.msra.mxu0 %v91
    %105 = vmatprep.subr.bf16.mxu0 0
    %106 = vmatpush1.bf16.msra.mxu0 %v90
    %107 = vmatprep.subr.bf16.mxu0 0
    %108 = vmatpush1.bf16.msra.mxu0 %v89
    %109 = vmatprep.subr.bf16.mxu0 0
    %110 = vmatpush1.bf16.msra.mxu0 %v88
    %111 = vmatprep.subr.bf16.mxu0 0
    %112 = vmatpush1.bf16.msra.mxu0 %v87
    %113 = vmatprep.subr.bf16.mxu0 0
    %114 = vmatpush1.bf16.msra.mxu0 %v86
    %115 = vmatprep.subr.bf16.mxu0 0
    %116 = vmatpush1.bf16.msra.mxu0 %v85
    %117 = vmatprep.subr.bf16.mxu0 0
    %118 = vmatpush2.bf16.msra.mxu0 0
    %119 = vmatprep.subr.bf16.mxu0 0
    %120 = vmatpush2.bf16.msra.mxu0 0
    %121 = vmatprep.subr.bf16.mxu0 0
    %122 = vmatpush2.bf16.msra.mxu0 0
    %123 = vmatprep.subr.bf16.mxu0 0
    %124 = vmatpush2.bf16.msra.mxu0 0
    %125 = vmatprep.subr.bf16.mxu0 0
    %126 = vmatpush2.bf16.msra.mxu0 0
    %127 = vmatprep.subr.bf16.mxu0 0
    %128 = vmatpush2.bf16.msra.mxu0 0
    %129 = vmatprep.subr.bf16.mxu0 0
    %130 = vmatpush2.bf16.msra.mxu0 0
    %131 = vmatprep.subr.bf16.mxu0 0
    %132 = vmatpush2.bf16.msra.mxu0 0
    %133 = vmatprep.mubr.bf16.mxu0 0
    %134 = vmatmul.mubr.bf16.gmra.mxu0 %v29
    %v135 = vpop.f32.mrf.mxu0
    %v136 = vadd.f32 %v51, %v135
    %v137 = vpop.f32.mrf.mxu0
    %v138 = vpop.f32.mrf.mxu0
    %v139 = vpop.f32.mrf.mxu0
    %140 = vdwg.mxu0
    %v141 = vmax.f32 %v136, 0.0
    %142 = vst [vmem:[%s3] sm:$0x3] %v141
    %v143 = vld [vmem:[%s0 + $0x1] sm:$0x1]
    %v144 = vld [vmem:[#allocation2 + $0x4] sm:$0xff]
    %v145 = vld [vmem:[#allocation2 + $0x1c] sm:$0xff]
    %v146 = vld [vmem:[#allocation2 + $0x34] sm:$0xff]
    %v147 = vld [vmem:[#allocation2 + $0x4c] sm:$0xff]
    %v148 = vld [vmem:[#allocation2 + $0x64] sm:$0xff]
    %v149 = vld [vmem:[#allocation2 + $0x7c] sm:$0xff]
    %v150 = vld [vmem:[#allocation2 + $0x94] sm:$0xff]
    %v151 = vld [vmem:[#allocation2 + $0xac] sm:$0xff]
    %v152 = vld [vmem:[#allocation2 + $0xc4] sm:$0xff]
    %v153 = vld [vmem:[#allocation2 + $0xdc] sm:$0xff]
    %v154 = vld [vmem:[#allocation2 + $0xf4] sm:$0xff]
    %v155 = vld [vmem:[#allocation2 + $0x10c] sm:$0xff]
    %v156 = vld [vmem:[#allocation2 + $0x124] sm:$0xff]
    %v157 = vld [vmem:[#allocation2 + $0x13c] sm:$0xff]
    %v158 = vld [vmem:[#allocation2 + $0x154] sm:$0xff]
    %v159 = vld [vmem:[#allocation2 + $0x16c] sm:$0xff]
    %v160 = vld [vmem:[%s2 + $0x1] sm:$0x3]
    %v162 = vlaneseq
    %v163 = vshrl.u32 %v162, 7
    %v164 = vsub.s32 0, %v163
    %v165 = vrot.slane %v160, %v164
    %v166 = vlaneseq
    %v167 = vshrl.u32 %v166, 7
    %v168 = vsub.s32 1, %v167
    %v169 = vrot.slane %v160, %v168
    %v188 = vunpack.c.l.b16 %v144
    %v189 = vunpack.c.h.b16 %v144
    %v190 = vunpack.c.l.b16 %v145
    %v191 = vunpack.c.h.b16 %v145
    %v192 = vunpack.c.l.b16 %v146
    %v193 = vunpack.c.h.b16 %v146
    %v194 = vunpack.c.l.b16 %v147
    %v195 = vunpack.c.h.b16 %v147
    %v196 = vunpack.c.l.b16 %v148
    %v197 = vunpack.c.h.b16 %v148
    %v198 = vunpack.c.l.b16 %v149
    %v199 = vunpack.c.h.b16 %v149
    %v200 = vunpack.c.l.b16 %v150
    %v201 = vunpack.c.h.b16 %v150
    %v202 = vunpack.c.l.b16 %v151
    %v203 = vunpack.c.h.b16 %v151
    %v204 = vunpack.c.l.b16 %v152
    %v205 = vunpack.c.h.b16 %v152
    %v206 = vunpack.c.l.b16 %v153
    %v207 = vunpack.c.h.b16 %v153
    %v208 = vunpack.c.l.b16 %v154
    %v209 = vunpack.c.h.b16 %v154
    %v210 = vunpack.c.l.b16 %v155
    %v211 = vunpack.c.h.b16 %v155
    %v212 = vunpack.c.l.b16 %v156
    %v213 = vunpack.c.h.b16 %v156
    %v214 = vunpack.c.l.b16 %v157
    %v215 = vunpack.c.h.b16 %v157
    %v216 = vunpack.c.l.b16 %v158
    %v217 = vunpack.c.h.b16 %v158
    %v218 = vunpack.c.l.b16 %v159
    %v219 = vunpack.c.h.b16 %v159
    %v220 = vpack.c.b16 %v190, %v188
    %v221 = vpack.c.b16 %v191, %v189
    %v222 = vpack.c.b16 %v194, %v192
    %v223 = vpack.c.b16 %v195, %v193
    %v224 = vpack.c.b16 %v198, %v196
    %v225 = vpack.c.b16 %v199, %v197
    %v226 = vpack.c.b16 %v202, %v200
    %v227 = vpack.c.b16 %v203, %v201
    %v228 = vpack.c.b16 %v206, %v204
    %v229 = vpack.c.b16 %v207, %v205
    %v230 = vpack.c.b16 %v210, %v208
    %v231 = vpack.c.b16 %v211, %v209
    %v232 = vpack.c.b16 %v214, %v212
    %v233 = vpack.c.b16 %v215, %v213
    %v234 = vpack.c.b16 %v218, %v216
    %v235 = vpack.c.b16 %v219, %v217
    %252 = vmatprep.subr.bf16.mxu0 %v235
    %253 = vmatpush1.bf16.msra.mxu0 %v234
    %254 = vmatprep.subr.bf16.mxu0 %v233
    %255 = vmatpush1.bf16.msra.mxu0 %v232
    %256 = vmatprep.subr.bf16.mxu0 %v231
    %257 = vmatpush1.bf16.msra.mxu0 %v230
    %258 = vmatprep.subr.bf16.mxu0 %v229
    %259 = vmatpush1.bf16.msra.mxu0 %v228
    %260 = vmatprep.subr.bf16.mxu0 %v227
    %261 = vmatpush1.bf16.msra.mxu0 %v226
    %262 = vmatprep.subr.bf16.mxu0 %v225
    %263 = vmatpush1.bf16.msra.mxu0 %v224
    %264 = vmatprep.subr.bf16.mxu0 %v223
    %265 = vmatpush1.bf16.msra.mxu0 %v222
    %266 = vmatprep.subr.bf16.mxu0 %v221
    %267 = vmatpush1.bf16.msra.mxu0 %v220
    %268 = vmatprep.subr.bf16.mxu0 0
    %269 = vmatpush2.bf16.msra.mxu0 0
    %270 = vmatprep.subr.bf16.mxu0 0
    %271 = vmatpush2.bf16.msra.mxu0 0
    %272 = vmatprep.subr.bf16.mxu0 0
    %273 = vmatpush2.bf16.msra.mxu0 0
    %274 = vmatprep.subr.bf16.mxu0 0
    %275 = vmatpush2.bf16.msra.mxu0 0
    %276 = vmatprep.subr.bf16.mxu0 0
    %277 = vmatpush2.bf16.msra.mxu0 0
    %278 = vmatprep.subr.bf16.mxu0 0
    %279 = vmatpush2.bf16.msra.mxu0 0
    %280 = vmatprep.subr.bf16.mxu0 0
    %281 = vmatpush2.bf16.msra.mxu0 0
    %282 = vmatprep.subr.bf16.mxu0 0
    %283 = vmatpush2.bf16.msra.mxu0 0
    %284 = vmatprep.mubr.bf16.mxu0 0
    %285 = vmatmul.mubr.bf16.gmra.mxu0 %v143
    %v286 = vpop.f32.mrf.mxu0
    %v287 = vadd.f32 %v165, %v286
    %v288 = vpop.f32.mrf.mxu0
    %v289 = vadd.f32 %v169, %v288
    %v290 = vpop.f32.mrf.mxu0
    %v291 = vpop.f32.mrf.mxu0
    %292 = vdwg.mxu0
    %v293 = vmax.f32 %v287, 0.0
    %v294 = vmax.f32 %v289, 0.0
    %v297 = vcombine.low %v293, %v294
    %v299 = vunpack.c.l.s4 1983009808
    %v300 = vunpack.c.0.s8 %v299
    %v301 = vlaneseq
    %v302 = vshrl.u32 %v301, 7
    %v303 = vsub.s32 %v300, %v302
    %v304 = vrot.slane %v297, %v303
    %306 = vst [vmem:[%s3 + $0x2] sm:$0xf] %v304
    %v307 = vld [vmem:[%s0 + $0x2] sm:$0x1]
    %v308 = vld [vmem:[#allocation2 + $0xc] sm:$0xff]
    %v309 = vld [vmem:[#allocation2 + $0x24] sm:$0xff]
    %v310 = vld [vmem:[#allocation2 + $0x3c] sm:$0xff]
    %v311 = vld [vmem:[#allocation2 + $0x54] sm:$0xff]
    %v312 = vld [vmem:[#allocation2 + $0x6c] sm:$0xff]
    %v313 = vld [vmem:[#allocation2 + $0x84] sm:$0xff]
    %v314 = vld [vmem:[#allocation2 + $0x9c] sm:$0xff]
    %v315 = vld [vmem:[#allocation2 + $0xb4] sm:$0xff]
    %v316 = vld [vmem:[#allocation2 + $0xcc] sm:$0xff]
    %v317 = vld [vmem:[#allocation2 + $0xe4] sm:$0xff]
    %v318 = vld [vmem:[#allocation2 + $0xfc] sm:$0xff]
    %v319 = vld [vmem:[#allocation2 + $0x114] sm:$0xff]
    %v320 = vld [vmem:[#allocation2 + $0x12c] sm:$0xff]
    %v321 = vld [vmem:[#allocation2 + $0x144] sm:$0xff]
    %v322 = vld [vmem:[#allocation2 + $0x15c] sm:$0xff]
    %v323 = vld [vmem:[#allocation2 + $0x174] sm:$0xff]
    %v324 = vld [vmem:[%s2 + $0x3] sm:$0x3]
    %v326 = vlaneseq
    %v327 = vshrl.u32 %v326, 7
    %v328 = vsub.s32 0, %v327
    %v329 = vrot.slane %v324, %v328
    %v330 = vlaneseq
    %v331 = vshrl.u32 %v330, 7
    %v332 = vsub.s32 1, %v331
    %v333 = vrot.slane %v324, %v332
    %v352 = vunpack.c.l.b16 %v308
    %v353 = vunpack.c.h.b16 %v308
    %v354 = vunpack.c.l.b16 %v309
    %v355 = vunpack.c.h.b16 %v309
    %v356 = vunpack.c.l.b16 %v310
    %v357 = vunpack.c.h.b16 %v310
    %v358 = vunpack.c.l.b16 %v311
    %v359 = vunpack.c.h.b16 %v311
    %v360 = vunpack.c.l.b16 %v312
    %v361 = vunpack.c.h.b16 %v312
    %v362 = vunpack.c.l.b16 %v313
    %v363 = vunpack.c.h.b16 %v313
    %v364 = vunpack.c.l.b16 %v314
    %v365 = vunpack.c.h.b16 %v314
    %v366 = vunpack.c.l.b16 %v315
    %v367 = vunpack.c.h.b16 %v315
    %v368 = vunpack.c.l.b16 %v316
    %v369 = vunpack.c.h.b16 %v316
    %v370 = vunpack.c.l.b16 %v317
    %v371 = vunpack.c.h.b16 %v317
    %v372 = vunpack.c.l.b16 %v318
    %v373 = vunpack.c.h.b16 %v318
    %v374 = vunpack.c.l.b16 %v319
    %v375 = vunpack.c.h.b16 %v319
    %v376 = vunpack.c.l.b16 %v320
    %v377 = vunpack.c.h.b16 %v320
    %v378 = vunpack.c.l.b16 %v321
    %v379 = vunpack.c.h.b16 %v321
    %v380 = vunpack.c.l.b16 %v322
    %v381 = vunpack.c.h.b16 %v322
    %v382 = vunpack.c.l.b16 %v323
    %v383 = vunpack.c.h.b16 %v323
    %v384 = vpack.c.b16 %v354, %v352
    %v385 = vpack.c.b16 %v355, %v353
    %v386 = vpack.c.b16 %v358, %v356
    %v387 = vpack.c.b16 %v359, %v357
    %v388 = vpack.c.b16 %v362, %v360
    %v389 = vpack.c.b16 %v363, %v361
    %v390 = vpack.c.b16 %v366, %v364
    %v391 = vpack.c.b16 %v367, %v365
    %v392 = vpack.c.b16 %v370, %v368
    %v393 = vpack.c.b16 %v371, %v369
    %v394 = vpack.c.b16 %v374, %v372
    %v395 = vpack.c.b16 %v375, %v373
    %v396 = vpack.c.b16 %v378, %v376
    %v397 = vpack.c.b16 %v379, %v377
    %v398 = vpack.c.b16 %v382, %v380
    %v399 = vpack.c.b16 %v383, %v381
    %416 = vmatprep.subr.bf16.mxu0 %v399
    %417 = vmatpush1.bf16.msra.mxu0 %v398
    %418 = vmatprep.subr.bf16.mxu0 %v397
    %419 = vmatpush1.bf16.msra.mxu0 %v396
    %420 = vmatprep.subr.bf16.mxu0 %v395
    %421 = vmatpush1.bf16.msra.mxu0 %v394
    %422 = vmatprep.subr.bf16.mxu0 %v393
    %423 = vmatpush1.bf16.msra.mxu0 %v392
    %424 = vmatprep.subr.bf16.mxu0 %v391
    %425 = vmatpush1.bf16.msra.mxu0 %v390
    %426 = vmatprep.subr.bf16.mxu0 %v389
    %427 = vmatpush1.bf16.msra.mxu0 %v388
    %428 = vmatprep.subr.bf16.mxu0 %v387
    %429 = vmatpush1.bf16.msra.mxu0 %v386
    %430 = vmatprep.subr.bf16.mxu0 %v385
    %431 = vmatpush1.bf16.msra.mxu0 %v384
    %432 = vmatprep.subr.bf16.mxu0 0
    %433 = vmatpush2.bf16.msra.mxu0 0
    %434 = vmatprep.subr.bf16.mxu0 0
    %435 = vmatpush2.bf16.msra.mxu0 0
    %436 = vmatprep.subr.bf16.mxu0 0
    %437 = vmatpush2.bf16.msra.mxu0 0
    %438 = vmatprep.subr.bf16.mxu0 0
    %439 = vmatpush2.bf16.msra.mxu0 0
    %440 = vmatprep.subr.bf16.mxu0 0
    %441 = vmatpush2.bf16.msra.mxu0 0
    %442 = vmatprep.subr.bf16.mxu0 0
    %443 = vmatpush2.bf16.msra.mxu0 0
    %444 = vmatprep.subr.bf16.mxu0 0
    %445 = vmatpush2.bf16.msra.mxu0 0
    %446 = vmatprep.subr.bf16.mxu0 0
    %447 = vmatpush2.bf16.msra.mxu0 0
    %448 = vmatprep.mubr.bf16.mxu0 0
    %449 = vmatmul.mubr.bf16.gmra.mxu0 %v307
    %v450 = vpop.f32.mrf.mxu0
    %v451 = vadd.f32 %v329, %v450
    %v452 = vpop.f32.mrf.mxu0
    %v453 = vadd.f32 %v333, %v452
    %v454 = vpop.f32.mrf.mxu0
    %v455 = vpop.f32.mrf.mxu0
    %456 = vdwg.mxu0
    %v457 = vmax.f32 %v451, 0.0
    %v458 = vmax.f32 %v453, 0.0
    %v461 = vcombine.low %v457, %v458
    %v463 = vunpack.c.l.s4 1983009808
    %v464 = vunpack.c.0.s8 %v463
    %v465 = vlaneseq
    %v466 = vshrl.u32 %v465, 7
    %v467 = vsub.s32 %v464, %v466
    %v468 = vrot.slane %v461, %v467
    %470 = vst [vmem:[%s3 + $0x6] sm:$0xf] %v468
    %v471 = vld [vmem:[%s0 + $0x3] sm:$0x1]
    %v472 = vld [vmem:[#allocation2 + $0x14] sm:$0xf]
    %v473 = vld [vmem:[#allocation2 + $0x2c] sm:$0xf]
    %v474 = vld [vmem:[#allocation2 + $0x44] sm:$0xf]
    %v475 = vld [vmem:[#allocation2 + $0x5c] sm:$0xf]
    %v476 = vld [vmem:[#allocation2 + $0x74] sm:$0xf]
    %v477 = vld [vmem:[#allocation2 + $0x8c] sm:$0xf]
    %v478 = vld [vmem:[#allocation2 + $0xa4] sm:$0xf]
    %v479 = vld [vmem:[#allocation2 + $0xbc] sm:$0xf]
    %v480 = vld [vmem:[#allocation2 + $0xd4] sm:$0xf]
    %v481 = vld [vmem:[#allocation2 + $0xec] sm:$0xf]
    %v482 = vld [vmem:[#allocation2 + $0x104] sm:$0xf]
    %v483 = vld [vmem:[#allocation2 + $0x11c] sm:$0xf]
    %v484 = vld [vmem:[#allocation2 + $0x134] sm:$0xf]
    %v485 = vld [vmem:[#allocation2 + $0x14c] sm:$0xf]
    %v486 = vld [vmem:[#allocation2 + $0x164] sm:$0xf]
    %v487 = vld [vmem:[#allocation2 + $0x17c] sm:$0xf]
    %v488 = vld [vmem:[%s2 + $0x5] sm:$0x1]
    %v490 = vlaneseq
    %v491 = vshrl.u32 %v490, 7
    %v492 = vsub.s32 0, %v491
    %v493 = vrot.slane %v488, %v492
    %v511 = vunpack.c.l.b16 %v472
    %v512 = vunpack.c.l.b16 %v473
    %v513 = vunpack.c.l.b16 %v474
    %v514 = vunpack.c.l.b16 %v475
    %v515 = vunpack.c.l.b16 %v476
    %v516 = vunpack.c.l.b16 %v477
    %v517 = vunpack.c.l.b16 %v478
    %v518 = vunpack.c.l.b16 %v479
    %v519 = vunpack.c.l.b16 %v480
    %v520 = vunpack.c.l.b16 %v481
    %v521 = vunpack.c.l.b16 %v482
    %v522 = vunpack.c.l.b16 %v483
    %v523 = vunpack.c.l.b16 %v484
    %v524 = vunpack.c.l.b16 %v485
    %v525 = vunpack.c.l.b16 %v486
    %v526 = vunpack.c.l.b16 %v487
    %v527 = vpack.c.b16 %v512, %v511
    %v528 = vpack.c.b16 %v514, %v513
    %v529 = vpack.c.b16 %v516, %v515
    %v530 = vpack.c.b16 %v518, %v517
    %v531 = vpack.c.b16 %v520, %v519
    %v532 = vpack.c.b16 %v522, %v521
    %v533 = vpack.c.b16 %v524, %v523
    %v534 = vpack.c.b16 %v526, %v525
    %543 = vmatprep.subr.bf16.mxu0 0
    %544 = vmatpush1.bf16.msra.mxu0 %v534
    %545 = vmatprep.subr.bf16.mxu0 0
    %546 = vmatpush1.bf16.msra.mxu0 %v533
    %547 = vmatprep.subr.bf16.mxu0 0
    %548 = vmatpush1.bf16.msra.mxu0 %v532
    %549 = vmatprep.subr.bf16.mxu0 0
    %550 = vmatpush1.bf16.msra.mxu0 %v531
    %551 = vmatprep.subr.bf16.mxu0 0
    %552 = vmatpush1.bf16.msra.mxu0 %v530
    %553 = vmatprep.subr.bf16.mxu0 0
    %554 = vmatpush1.bf16.msra.mxu0 %v529
    %555 = vmatprep.subr.bf16.mxu0 0
    %556 = vmatpush1.bf16.msra.mxu0 %v528
    %557 = vmatprep.subr.bf16.mxu0 0
    %558 = vmatpush1.bf16.msra.mxu0 %v527
    %559 = vmatprep.subr.bf16.mxu0 0
    %560 = vmatpush2.bf16.msra.mxu0 0
    %561 = vmatprep.subr.bf16.mxu0 0
    %562 = vmatpush2.bf16.msra.mxu0 0
    %563 = vmatprep.subr.bf16.mxu0 0
    %564 = vmatpush2.bf16.msra.mxu0 0
    %565 = vmatprep.subr.bf16.mxu0 0
    %566 = vmatpush2.bf16.msra.mxu0 0
    %567 = vmatprep.subr.bf16.mxu0 0
    %568 = vmatpush2.bf16.msra.mxu0 0
    %569 = vmatprep.subr.bf16.mxu0 0
    %570 = vmatpush2.bf16.msra.mxu0 0
    %571 = vmatprep.subr.bf16.mxu0 0
    %572 = vmatpush2.bf16.msra.mxu0 0
    %573 = vmatprep.subr.bf16.mxu0 0
    %574 = vmatpush2.bf16.msra.mxu0 0
    %575 = vmatprep.mubr.bf16.mxu0 0
    %576 = vmatmul.mubr.bf16.gmra.mxu0 %v471
    %v577 = vpop.f32.mrf.mxu0
    %v578 = vadd.f32 %v493, %v577
    %v579 = vpop.f32.mrf.mxu0
    %v580 = vpop.f32.mrf.mxu0
    %v581 = vpop.f32.mrf.mxu0
    %582 = vdwg.mxu0
    %v583 = vmax.f32 %v578, 0.0
    %584 = vst [vmem:[%s3 + $0xa] sm:$0x3] %v583
    // Predicated region
    $region18: #{quad_modal_forward.1} parent=1 // pred_check
      _
    $region19: #{quad_modal_forward.1} parent=1 // pred_check_branch
      %586 = sbr.rel (0) target = $region21
    $region20: #{quad_modal_forward.1} parent=1 // pred_region
      _
    $region21: #{quad_modal_forward.1} parent=1 // pred_fallthru
      _
    // Predicated region
    $region22: #{quad_modal_forward.1} parent=1 // pred_check
      _
    $region23: #{quad_modal_forward.1} parent=1 // pred_check_branch
      %588 = sbr.rel (0) target = $region25
    $region24: #{quad_modal_forward.1} parent=1 // pred_region
      _
    $region25: #{quad_modal_forward.1} parent=1 // pred_fallthru
      _
    %589 = vsyncpa [#allocation3], 1

</llo_original>
